<compile_context>
chip_gen: v5e
topology: v5e:2x2
jax: 0.10.0
libtpu: 0.0.40
codegen_flags: <defaults>
</compile_context>

<pallas_src>
import math

import jax
import jax.numpy as jnp
from jax.experimental import pallas as pl
from jax.experimental.pallas import tpu as pltpu

_LANES = 128
_MIB = 1024 * 1024
_MIN_PALLAS_ELEMS = 1 << 20          # ~1M elements: below this a fused XLA add wins


def _build_pe(embed_size: int, max_len: int = 512) -> jnp.ndarray:
    """(max_len, embed_size) f32 table matching the PyTorch loop exactly:
         pe[pos, i]     = sin(pos / 10000 ** (2 * i       / embed_size))
         pe[pos, i + 1] = cos(pos / 10000 ** (2 * (i + 1) / embed_size))
       for i in range(0, embed_size, 2)."""
    pos = jnp.arange(max_len, dtype=jnp.float32)[:, None]             # (max_len, 1)
    i_even = jnp.arange(0, embed_size, 2, dtype=jnp.float32)           # (E//2,)
    div_even = jnp.power(10000.0, 2.0 * i_even / embed_size)
    div_odd = jnp.power(10000.0, 2.0 * (i_even + 1.0) / embed_size)
    pe_even = jnp.sin(pos / div_even[None, :])                         # (max_len, E//2)
    pe_odd = jnp.cos(pos / div_odd[None, :])                           # (max_len, E//2)
    return jnp.stack([pe_even, pe_odd], axis=-1).reshape(max_len, embed_size)


def _sublane(dtype) -> int:
    # sublane quantum for the second-to-last block dim: 8 (f32), 16 (bf16), 32 (i8)
    return max(8, 32 // jnp.dtype(dtype).itemsize)


def _default_target_tile_bytes() -> int:
    # 2 MiB is on the measured HBM-roofline plateau for v5e/v6e; v7x's ~2.3x faster
    # HBM makes the ~0.35us per-step fixed cost relatively larger, so prefer 4 MiB.
    try:
        name = str(getattr(pltpu.get_tpu_info(), "chip_version", "")).lower()
        if "v7" in name or "tpu7" in name:
            return 4 * _MIB
    except Exception:
        pass
    return 2 * _MIB


def _pick_row_tile(rows: int, sub: int, bytes_per_row: int, target_bytes: int) -> int:
    """Row-block length: a multiple of `sub`, at most ~target_bytes per (tile, C)
    slab, and strictly < rows whenever rows > sub so the leading 'parallel' grid
    axis always has >= 2 blocks (keeps both v7x TensorCores busy)."""
    budget = max(sub, ((int(target_bytes) // max(1, int(bytes_per_row))) // sub) * sub)
    tile = min(budget, max(sub, (rows // sub) * sub))
    if rows > sub and tile >= rows:
        tile = ((rows // 2 + sub - 1) // sub) * sub    # ~balanced 2-way split
    return tile


def _add_pe_kernel(x_ref, pe_ref, o_ref):
    # x_ref / o_ref: (Bblk, tile, C) VMEM tiles; pe_ref: (tile, C) broadcast over
    # the batch block (same-layout VMEM re-read -> straight vld/vadd/vst stream).
    o_ref[...] = x_ref[...] + pe_ref[...][None, :, :]


def _pallas_add(x3, pe2, bblk, tile, *, vmem_limit, donate_x=False):
    """x3: (B, R, C); pe2: (Rpe, C) with Rpe >= rows covered by the grid.
    out[b, r, c] = x3[b, r, c] + pe2[r, c].  The grid only touches the first
    cdiv(R, tile) row blocks of pe2, so pe2 may be the full un-sliced table."""
    B, R, C = x3.shape
    grid = (pl.cdiv(R, tile), pl.cdiv(B, bblk))    # batch innermost: pe block reused
    extra = {"input_output_aliases": {0: 0}} if donate_x else {}
    return pl.pallas_call(
        _add_pe_kernel,
        out_shape=jax.ShapeDtypeStruct((B, R, C), x3.dtype),
        grid_spec=pltpu.PrefetchScalarGridSpec(
            num_scalar_prefetch=0,
            grid=grid,
            in_specs=[
                pl.BlockSpec((bblk, tile, C), lambda s, b: (b, s, 0)),
                pl.BlockSpec((tile, C), lambda s, b: (s, 0)),
            ],
            out_specs=pl.BlockSpec((bblk, tile, C), lambda s, b: (b, s, 0)),
        ),
        compiler_params=pltpu.CompilerParams(
            dimension_semantics=("parallel", "parallel"),
            vmem_limit_bytes=int(vmem_limit),
        ),
        **extra,
    )(x3, pe2)


class PositionalEncoding:
    """JAX/Pallas port of the PyTorch PositionalEncoding module."""

    def __init__(self, embed_size, max_len=512, dtype=jnp.float32,
                 target_tile_bytes=None):
        self.embed_size = int(embed_size)
        self.max_len = int(max_len)
        self.dtype = jnp.dtype(dtype)
        self.target_tile_bytes = int(target_tile_bytes) if target_tile_bytes else \
            _default_target_tile_bytes()
        # Build + cast ONCE at init (no per-call cast/slice HBM pass).
        self.pe = _build_pe(self.embed_size, self.max_len).astype(self.dtype)
        # Lane-dense fold of the full table, built once.
        if (self.max_len * self.embed_size) % _LANES == 0:
            self.pe_folded = self.pe.reshape(-1, _LANES)
        else:
            self.pe_folded = None

    def __call__(self, x, *, use_pallas=None, donate_x=False):
        B, S, E = x.shape
        assert E == self.embed_size, "embed size mismatch"
        assert S <= self.max_len, "sequence longer than max_len"

        pe_full = self.pe if x.dtype == self.pe.dtype else self.pe.astype(x.dtype)

        if use_pallas is None:
            use_pallas = x.size >= _MIN_PALLAS_ELEMS
        if not use_pallas:
            return x + pe_full[None, :S, :]        # tiny inputs: fused XLA add wins

        itemsize = jnp.dtype(x.dtype).itemsize
        sub = _sublane(x.dtype)
        target = self.target_tile_bytes

        lane_dense = (S * E) % _LANES == 0 and (self.max_len * E) % _LANES == 0
        if lane_dense:
            # Fold (S, E) -> (rows, 128): every store is a full-width vst.
            rows, C = (S * E) // _LANES, _LANES
            x3 = x.reshape(B, rows, C)
            pe2 = (self.pe_folded
                   if (self.pe_folded is not None and pe_full is self.pe)
                   else pe_full.reshape(-1, _LANES))
        else:
            rows, C = S, E
            x3, pe2 = x, pe_full

        if rows >= sub:
            tile = _pick_row_tile(rows, sub, C * itemsize, target)
        else:
            # Degenerate small case: the row block must equal the full row extent of
            # BOTH x and pe, so slice pe down (a few KiB -- negligible HBM traffic).
            tile = rows
            pe2 = pe2[:rows, :]

        bblk = max(1, min(B, target // max(1, tile * C * itemsize)))

        # Double-buffered x-in, out and pe streams -> explicit scoped-VMEM limit.
        vmem_need = 2 * (2 * bblk + 1) * tile * C * itemsize
        vmem_limit = min(48 * _MIB, max(32 * _MIB, vmem_need + 4 * _MIB))

        out = _pallas_add(x3, pe2, bblk, tile, vmem_limit=vmem_limit,
                          donate_x=donate_x)
        return out.reshape(B, S, E) if lane_dense else out


def _pe_loop_reference(embed_size: int, n_rows: int) -> jnp.ndarray:
    """Direct transcription of the PyTorch double loop (first n_rows rows)."""
    out = [[0.0] * embed_size for _ in range(n_rows)]
    for pos in range(n_rows):
        for i in range(0, embed_size, 2):
            out[pos][i] = math.sin(pos / 10000 ** (2 * i / embed_size))
            out[pos][i + 1] = math.cos(pos / 10000 ** (2 * (i + 1) / embed_size))
    return jnp.asarray(out, dtype=jnp.float32)


if __name__ == "__main__":
    key = jax.random.PRNGKey(0)
    k1, k2, k3, k4 = jax.random.split(key, 4)

    # 0) Encoding table matches the PyTorch double loop.
    mod64 = PositionalEncoding(64, max_len=512)
    assert jnp.allclose(mod64.pe[:16], _pe_loop_reference(64, 16), atol=2e-4), \
        "pe table mismatch vs PyTorch loop"

    def check(mod, x):
        B, S, E = x.shape
        out = jax.block_until_ready(mod(x, use_pallas=True))
        ref = x + mod.pe[None, :S, :].astype(x.dtype)
        assert out.shape == x.shape
        assert jnp.allclose(out, ref, atol=1e-6), f"mismatch for shape {x.shape}"

    # 1) Lane-dense, zero-copy (un-sliced) pe, batch-grouped block: (2, 16, 64)
    x1 = jax.random.normal(k1, (2, 16, 64), dtype=jnp.float32)
    check(mod64, x1)

    # 2) Lane-dense, zero-copy pe, forced 2-way row split (v7x megacore path)
    x2 = jax.random.normal(k2, (2, 32, 64), dtype=jnp.float32)
    check(mod64, x2)

    # 3) Degenerate rows < sublane -> sliced-pe path: (2, 8, 32)
    mod32 = PositionalEncoding(32, max_len=512)
    x3 = jax.random.normal(k3, (2, 8, 32), dtype=jnp.float32)
    check(mod32, x3)

    # 4) Non-lane-dense fallback (S*E not a multiple of 128): (2, 8, 40)
    mod40 = PositionalEncoding(40, max_len=64)
    x4 = jax.random.normal(k4, (2, 8, 40), dtype=jnp.float32)
    check(mod40, x4)

    print("KERNEL_OK")
</pallas_src>

<mosaic_0001>
module attributes {stable_mosaic.version = 11 : i64} {
  func.func @_add_pe_kernel(%arg0: i32, %arg1: i32, %arg2: memref<2x8x128xf32, #tpu.memory_space<vmem>>, %arg3: memref<8x128xf32, #tpu.memory_space<vmem>>, %arg4: memref<2x8x128xf32, #tpu.memory_space<vmem>>) attributes {dimension_semantics = [#tpu.dimension_semantics<parallel>, #tpu.dimension_semantics<parallel>], iteration_bounds = array<i64: 1, 1>, scalar_prefetch = 0 : i64, scratch_operands = 0 : i64, tpu.core_type = #tpu.core_type<tc>, window_params = [{transform_indices = @transform_0, window_bounds = array<i64: 2, 8, 128>}, {transform_indices = @transform_1, window_bounds = array<i64: 8, 128>}, {transform_indices = @transform_2, window_bounds = array<i64: 2, 8, 128>}]} {
    %c0 = arith.constant 0 : index
    %c0_0 = arith.constant 0 : index
    %c0_1 = arith.constant 0 : index
    %0 = vector.load %arg2[%c0, %c0_0, %c0_1] : memref<2x8x128xf32, #tpu.memory_space<vmem>>, vector<2x8x128xf32>
    %c0_2 = arith.constant 0 : index
    %c0_3 = arith.constant 0 : index
    %1 = vector.load %arg3[%c0_2, %c0_3] : memref<8x128xf32, #tpu.memory_space<vmem>>, vector<8x128xf32>
    %2 = vector.shape_cast %1 : vector<8x128xf32> to vector<1x8x128xf32>
    %3 = vector.broadcast %2 : vector<1x8x128xf32> to vector<2x8x128xf32>
    %4 = arith.addf %0, %3 : vector<2x8x128xf32>
    %c0_4 = arith.constant 0 : index
    %c0_5 = arith.constant 0 : index
    %c0_6 = arith.constant 0 : index
    %5 = vector.load %arg4[%c0_4, %c0_5, %c0_6] : memref<2x8x128xf32, #tpu.memory_space<vmem>>, vector<2x8x128xf32>
    tpu.vector_store %arg4[%c0_4, %c0_5, %c0_6], %4 {strides = array<i32>} : memref<2x8x128xf32, #tpu.memory_space<vmem>>, vector<2x8x128xf32>,
    return
  }
  func.func @transform_0(%arg0: i32, %arg1: i32) -> (i32, i32, i32) {
    %c0_i32 = arith.constant 0 : i32
    %c0_i32_0 = arith.constant 0 : i32
    return %arg1, %arg0, %c0_i32 : i32, i32, i32
  }
  func.func @transform_1(%arg0: i32, %arg1: i32) -> (i32, i32) {
    %c0_i32 = arith.constant 0 : i32
    %c0_i32_0 = arith.constant 0 : i32
    return %arg0, %c0_i32 : i32, i32
  }
  func.func @transform_2(%arg0: i32, %arg1: i32) -> (i32, i32, i32) {
    %c0_i32 = arith.constant 0 : i32
    %c0_i32_0 = arith.constant 0 : i32
    return %arg1, %arg0, %c0_i32 : i32, i32, i32
  }
}

</mosaic_0001>

<llo_original>
// kernel: tpu_custom_call.1
$region0: #{tpu_custom_call.1}
  #allocation0 [shape = 'u32[]', space=smem, size = 0x4, offset = 0x4, fixed_abs, tag = 'smem constant byte address 0x4 - core index']
  #allocation1 [shape = 'u32[72,128]{1,0:T(1,128)}', space=vmem, size = 0x9000, scoped, tag = 'internal scratch']
  %s0 = inlined_call_operand.hbm [shape: f32[2,8,128], index: 0, kind: input, shape index: {}]
  %s1 = inlined_call_operand.hbm [shape: f32[256,128], index: 1, kind: input, shape index: {}]
  %s2 = inlined_call_operand.hbm [shape: f32[2,8,128], index: 2, kind: output, shape index: {}]
  %s3 = sld [smem:[#allocation0]]
  $region26: #{tpu_custom_call.1} parent=0
    _
  %s5 = ssub.s32 1, %s3
  %s6 = scalar_select 0, %s5, %s3
  $region1: #{tpu_custom_call.1} parent=0
    #allocation2 [shape = 'u8[8192]{0}', space=vmem, size = 0x2000, scoped, tag = 'input window, operand 0, single buffered']
    #allocation3 [shape = 's32[1]{0}', space=sflag, size = 0x4, scoped, tag = 'scoped memory for tpu_custom_call.1']
    #allocation4 [shape = 's32[1]{0}', space=sflag, size = 0x4, scoped, tag = 'scoped memory for tpu_custom_call.1']
    #allocation5 [shape = 'u8[4096]{0}', space=vmem, size = 0x1000, scoped, tag = 'input window, operand 1, single buffered']
    #allocation6 [shape = 's32[1]{0}', space=sflag, size = 0x4, scoped, tag = 'scoped memory for tpu_custom_call.1']
    #allocation7 [shape = 'u8[8192]{0}', space=vmem, size = 0x2000, scoped, tag = 'output window, operand 0, single buffered']
    %7 = vsyncpa [#allocation3], 0
    %8 = vsyncpa [#allocation6], 0
    %9 = vsyncpa [#allocation4], 0
    // Predicated region
    $region2: #{tpu_custom_call.1} parent=1 // pred_check
      _
    $region3: #{tpu_custom_call.1} parent=1 // pred_check_branch
      %11 = sbr.rel (0) target = $region5
    $region4: #{tpu_custom_call.1} parent=1 // pred_region
      %13 = vsyncadd [#allocation3], 0
      %s14 = sshll.u32 %s0, 4
      %s15 = int_to_ptr.hbm [resolvable:$true] %s14
      %s16 = sshll.u32 [#allocation2], 4
      %s17 = int_to_ptr.vmem [resolvable:$true] %s16
      %22 = dma.hbm_to_vmem [thread:$0]  %s15, 256, %s17, [#allocation3], 128, 128, 8
    $region5: #{tpu_custom_call.1} parent=1 // pred_fallthru
      _
    // Predicated region
    $region6: #{tpu_custom_call.1} parent=1 // pred_check
      _
    $region7: #{tpu_custom_call.1} parent=1 // pred_check_branch
      %24 = sbr.rel (0) target = $region9
    $region8: #{tpu_custom_call.1} parent=1 // pred_region
      %26 = vsyncadd [#allocation6], 0
      %s28 = sshll.u32 %s1, 4
      %s29 = int_to_ptr.hbm [resolvable:$true] %s28
      %s30 = sshll.u32 [#allocation5], 4
      %s31 = int_to_ptr.vmem [resolvable:$true] %s30
      %33 = dma.hbm_to_vmem [thread:$0]  %s29, 128, %s31, [#allocation6]
    $region9: #{tpu_custom_call.1} parent=1 // pred_fallthru
      _
    // Predicated region
    $region10: #{tpu_custom_call.1} parent=1 // pred_check
      _
    $region11: #{tpu_custom_call.1} parent=1 // pred_check_branch
      %35 = sbr.rel (0) target = $region13
    $region12: #{tpu_custom_call.1} parent=1 // pred_region
      %37 = dma.done [#allocation3], 256
    $region13: #{tpu_custom_call.1} parent=1 // pred_fallthru
      _
    // Predicated region
    $region14: #{tpu_custom_call.1} parent=1 // pred_check
      _
    $region15: #{tpu_custom_call.1} parent=1 // pred_check_branch
      %39 = sbr.rel (0) target = $region17
    $region16: #{tpu_custom_call.1} parent=1 // pred_region
      %41 = dma.done [#allocation6], 128
    $region17: #{tpu_custom_call.1} parent=1 // pred_fallthru
      _
    %v42 = vld [vmem:[#allocation2] sm:$0xff]
    %v43 = vld [vmem:[#allocation2 + $0x8] sm:$0xff]
    %v44 = vld [vmem:[#allocation5] sm:$0xff]
    %v45 = vadd.f32 %v42, %v44
    %v46 = vadd.f32 %v43, %v44
    %47 = vst [vmem:[#allocation7] sm:$0xff] %v45
    %48 = vst [vmem:[#allocation7 + $0x8] sm:$0xff] %v46
    // Predicated region
    $region18: #{tpu_custom_call.1} parent=1 // pred_check
      _
    $region19: #{tpu_custom_call.1} parent=1 // pred_check_branch
      %50 = sbr.rel (0) target = $region21
    $region20: #{tpu_custom_call.1} parent=1 // pred_region
      %52 = vsyncadd [#allocation4], 0
      %s53 = sshll.u32 [#allocation7], 4
      %s54 = int_to_ptr.vmem [resolvable:$true] %s53
      %s55 = sshll.u32 %s2, 4
      %s56 = int_to_ptr.hbm [resolvable:$true] %s55
      %61 = dma.vmem_to_hbm [thread:$0]  %s54, 256, %s56, [#allocation4], 128, 128, 8
    $region21: #{tpu_custom_call.1} parent=1 // pred_fallthru
      _
    // Predicated region
    $region22: #{tpu_custom_call.1} parent=1 // pred_check
      _
    $region23: #{tpu_custom_call.1} parent=1 // pred_check_branch
      %63 = sbr.rel (0) target = $region25
    $region24: #{tpu_custom_call.1} parent=1 // pred_region
      %65 = dma.done [#allocation4], 256
    $region25: #{tpu_custom_call.1} parent=1 // pred_fallthru
      _
    %66 = vsyncpa [#allocation3], 1
    %67 = vsyncpa [#allocation6], 1
    %68 = vsyncpa [#allocation4], 1

</llo_original>
